<compile_context>
chip_gen: v7x
topology: tpu7x:2x2x1
jax: 0.10.0
libtpu: 0.0.40
codegen_flags: <defaults>
</compile_context>

<pallas_src>
import functools

import numpy as np
import jax
import jax.numpy as jnp
from jax import lax
from jax.experimental import pallas as pl
from jax.experimental.pallas import tpu as pltpu


# ---------------------------------------------------------------------------
# Precomputed (deterministic) separable linear operators.
# ---------------------------------------------------------------------------
def _avg_pool_matrix(size, k, pad):
    """Row operator for AvgPool2d(k, stride=k, padding=pad, count_include_pad=True)."""
    out = (size + 2 * pad - k) // k + 1
    m = np.zeros((out, size), dtype=np.float32)
    for o in range(out):
        start = o * k - pad
        for i in range(start, start + k):
            if 0 <= i < size:
                m[o, i] = 1.0 / k       # padded zeros still count in the divisor
    return m


def _bilinear_weights(out_size, in_size):
    """F.interpolate(mode='bilinear', align_corners=False) source indices/weights."""
    scale = in_size / out_size
    j = np.arange(out_size, dtype=np.float64)
    src = np.maximum((j + 0.5) * scale - 0.5, 0.0)
    i0 = np.minimum(np.floor(src).astype(np.int64), in_size - 1)
    i1 = np.minimum(i0 + 1, in_size - 1)
    w1 = (src - i0).astype(np.float32)
    w0 = (1.0 - w1).astype(np.float32)
    return i0, i1, w0, w1


def _bilinear_matrix(out_size, in_size):
    i0, i1, w0, w1 = _bilinear_weights(out_size, in_size)
    m = np.zeros((out_size, in_size), dtype=np.float32)
    m[np.arange(out_size), i0] += w0
    m[np.arange(out_size), i1] += w1
    return m


def _block_diag(block, n):
    r, c = block.shape
    out = np.zeros((n * r, n * c), dtype=np.float32)
    for i in range(n):
        out[i * r:(i + 1) * r, i * c:(i + 1) * c] = block
    return out


# ---------------------------------------------------------------------------
# Generation-aware sizing helpers.
# ---------------------------------------------------------------------------
def _vmem_capacity_bytes():
    try:
        return int(pltpu.get_tpu_info().vmem_capacity_bytes)
    except Exception:
        return 64 * 1024 * 1024          # v7x-safe fallback (smallest VMEM)


def _choose_channel_block(C, W, lane_target=256):
    """Small lane-dense channel group.  Never maximize Cb: the block-diagonal
    column operators waste FLOPs/VMEM ~ Cb^2.  Falls back to Cb == C (a full
    dim is always a legal block) when no divisor gives 128-lane alignment."""
    dense = [cb for cb in range(1, C + 1) if C % cb == 0 and (cb * W) % 128 == 0]
    if not dense:
        return C
    within = [cb for cb in dense if cb * W <= lane_target]
    return max(within) if within else min(dense)


def _choose_batch_block(N, Cg, in_img_bytes, out_img_bytes, op_bytes, vmem_budget):
    """Largest divisor of N whose double-buffered tiles fit the VMEM budget,
    capped near a ~2 MiB per-step input DMA, keeping >= 2 grid steps so both
    v7x TensorCores get work when possible."""
    target = 2 << 20
    divs = [d for d in range(1, N + 1) if N % d == 0]
    fitting = [d for d in divs
               if 2 * d * (in_img_bytes + out_img_bytes) + 2 * op_bytes <= vmem_budget]
    if not fitting:
        fitting = [1]
    nb = fitting[0]
    for d in fitting:                      # grow while per-step input DMA <= target
        if d * in_img_bytes <= target:
            nb = d
    if Cg * (N // nb) < 2:                 # megacore guard
        for d in reversed(fitting):
            if Cg * (N // d) >= 2:
                nb = d
                break
    return nb


# ---------------------------------------------------------------------------
# Pallas kernel: pool (+conv halo) -> depthwise 3x3 (BN-scaled) -> +shift,ReLU
#                -> bilinear upsample.  One (Nb, H, Cb*W) tile per grid step.
# ---------------------------------------------------------------------------
def _s2block_kernel(x_ref, ahp_ref, dcol_ref, uh_ref, uwb_ref, par_ref, o_ref,
                    *, Nb, Ho, Wo, Cb):
    CbWo = Cb * Wo

    # Operator matrices / per-channel params: loaded once, reused for all Nb
    # images in this grid step.
    ahp = ahp_ref[...]            # (Ho+2, H)     bf16, conv row-halo folded in
    uh = uh_ref[...]              # (H, Ho)       bf16, shared row upsample
    uwb = uwb_ref[...]            # (CbWo, Cb*W)  bf16, block-diag column upsample
    par = par_ref[...]            # (10, CbWo)    f32: 9 BN-scaled taps + BN shift
    wrows = [par[i] for i in range(9)]
    shift_row = par[9]

    def body(b, carry):
        x = x_ref[b].astype(jnp.bfloat16)                               # (H, Cb*W)

        # Row pooling with the conv row-halo folded in (rows 0 / Ho+1 zero).
        r = jnp.dot(ahp, x, preferred_element_type=jnp.float32)         # (Ho+2, Cb*W)
        r16 = r.astype(jnp.bfloat16)

        # Column pooling, one block-diagonal matmul per conv column tap so
        # every tap result starts at lane 0 (no unaligned lane slices), then
        # the depthwise 3x3 as 9 broadcast multiply-adds (BN scale folded in).
        acc = jnp.zeros((Ho, CbWo), jnp.float32)
        for dw in range(3):
            t = jnp.dot(r16, dcol_ref[dw],
                        preferred_element_type=jnp.float32)             # (Ho+2, CbWo)
            for dh in range(3):
                acc = acc + t[dh:dh + Ho, :] * wrows[3 * dh + dw]

        # BatchNorm shift + ReLU.
        # TODO(synk): training-mode BatchNorm (batch statistics over N,H,W) is
        # not computed here; inference-mode running statistics are folded in.
        y = jnp.maximum(acc + shift_row, 0.0).astype(jnp.bfloat16)      # (Ho, CbWo)

        # Bilinear upsample: block-diag column upsample, then shared row
        # upsample.  Output tile is lane-dense (Cb*W lanes).
        u = jnp.dot(y, uwb, preferred_element_type=jnp.float32)         # (Ho, Cb*W)
        out = jnp.dot(uh, u.astype(jnp.bfloat16),
                      preferred_element_type=jnp.float32)               # (H, Cb*W)
        o_ref[b] = out.astype(o_ref.dtype)
        return carry

    lax.fori_loop(0, Nb, body, 0, unroll=True)


# ---------------------------------------------------------------------------
# Lane-dense (N, H, C*W) entry point — use directly for chained S2Blocks to
# avoid the NCHW relayout passes through HBM.
# ---------------------------------------------------------------------------
def s2block_forward_hwc(x2d, dw_weight, gamma, beta, running_mean, running_var,
                        *, channels, height, width, kernel_size, eps=1e-5,
                        out_dtype=None):
    N = x2d.shape[0]
    C, H, W = channels, height, width
    k = int(kernel_size)
    p = k // 2
    Ho = (H + 2 * p - k) // k + 1
    Wo = (W + 2 * p - k) // k + 1
    out_dtype = x2d.dtype if out_dtype is None else out_dtype

    vmem_cap = _vmem_capacity_bytes()
    vmem_limit = min(vmem_cap * 3 // 4, 96 * 1024 * 1024)   # 48 MiB on v7x, 96 MiB v5e/v6e

    Cb = _choose_channel_block(C, W)
    Cg = C // Cb
    CbW, CbWo = Cb * W, Cb * Wo

    # --- constant separable operators (compile-time constants under jit) ----
    ah = _avg_pool_matrix(H, k, p)                         # (Ho, H)
    aw = _avg_pool_matrix(W, k, p)                         # (Wo, W)
    ah_pad = np.zeros((Ho + 2, H), np.float32)
    ah_pad[1:Ho + 1] = ah                                  # zero rows = conv row pad
    aw_pad = np.zeros((Wo + 2, W), np.float32)
    aw_pad[1:Wo + 1] = aw                                  # zero rows = conv col pad
    # One lane-aligned block-diagonal column-pool operator per conv column tap.
    dcol = np.stack([_block_diag(aw_pad[dw:dw + Wo, :].T, Cb) for dw in range(3)])
    #  -> (3, Cb*W, Cb*Wo)
    uh = _bilinear_matrix(H, Ho)                           # (H, Ho)
    uw_blk = _block_diag(_bilinear_matrix(W, Wo).T, Cb)    # (Cb*Wo, Cb*W)

    # bf16 MXU operands (f32 accumulation in-kernel); halves operand DMA/VMEM.
    ah_pad = jnp.asarray(ah_pad, jnp.bfloat16)
    dcol = jnp.asarray(dcol, jnp.bfloat16)
    uh = jnp.asarray(uh, jnp.bfloat16)
    uw_blk = jnp.asarray(uw_blk, jnp.bfloat16)

    # --- per-channel params: BN scale folded into the 9 depthwise taps ------
    scale = (gamma / jnp.sqrt(running_var + eps)).astype(jnp.float32)        # (C,)
    shift = (beta - running_mean * scale).astype(jnp.float32)                # (C,)
    wflat = dw_weight.reshape(C, 9).astype(jnp.float32) * scale[:, None]     # (C, 9)
    rows = jnp.concatenate([wflat, shift[:, None]], axis=1)                  # (C, 10)
    par = jnp.broadcast_to(rows[:, :, None], (C, 10, Wo))
    par = par.reshape(Cg, Cb, 10, Wo).transpose(0, 2, 1, 3).reshape(Cg, 10, CbWo)

    # --- tile sizing (generation-aware) --------------------------------------
    in_img_bytes = H * CbW * x2d.dtype.itemsize
    out_img_bytes = H * CbW * jnp.dtype(out_dtype).itemsize
    op_bytes = 2 * ((Ho + 2) * H + 3 * CbW * CbWo + H * Ho + CbWo * CbW) + 4 * 10 * CbWo
    Nb = _choose_batch_block(N, Cg, in_img_bytes, out_img_bytes, op_bytes,
                             vmem_budget=vmem_limit // 2)

    kernel = functools.partial(_s2block_kernel, Nb=Nb, Ho=Ho, Wo=Wo, Cb=Cb)

    flops_per_img = 2 * ((Ho + 2) * H * CbW
                         + 3 * (Ho + 2) * CbW * CbWo
                         + Ho * CbWo * CbW
                         + H * Ho * CbW)
    cost = pl.CostEstimate(
        flops=int(N * Cg * flops_per_img),
        transcendentals=0,
        bytes_accessed=int(N * H * C * W
                           * (x2d.dtype.itemsize + jnp.dtype(out_dtype).itemsize)))

    return pl.pallas_call(
        kernel,
        out_shape=jax.ShapeDtypeStruct((N, H, C * W), out_dtype),
        grid_spec=pltpu.PrefetchScalarGridSpec(
            num_scalar_prefetch=0,
            grid=(N // Nb, Cg),
            in_specs=[
                pl.BlockSpec((Nb, H, CbW), lambda n, g: (n, 0, g)),       # x tiles
                pl.BlockSpec((Ho + 2, H), lambda n, g: (0, 0)),           # row pool (+halo)
                pl.BlockSpec((3, CbW, CbWo), lambda n, g: (0, 0, 0)),     # col-pool taps
                pl.BlockSpec((H, Ho), lambda n, g: (0, 0)),               # row upsample
                pl.BlockSpec((CbWo, CbW), lambda n, g: (0, 0)),           # col upsample
                pl.BlockSpec((None, 10, CbWo), lambda n, g: (g, 0, 0)),   # conv/BN lanes
            ],
            out_specs=pl.BlockSpec((Nb, H, CbW), lambda n, g: (n, 0, g)),
        ),
        compiler_params=pltpu.CompilerParams(
            dimension_semantics=("parallel", "parallel"),
            vmem_limit_bytes=int(vmem_limit)),
        cost_estimate=cost,
    )(x2d, ah_pad, dcol, uh, uw_blk, par)


# ---------------------------------------------------------------------------
# NCHW -> NCHW wrapper (jit keeps the operator matrices as compile-time
# constants; the two relayouts are the price of the NCHW interface).
# ---------------------------------------------------------------------------
@functools.partial(jax.jit, static_argnames=("kernel_size",))
def s2block_forward(x, dw_weight, gamma, beta, running_mean, running_var,
                    kernel_size, eps=1e-5):
    N, C, H, W = x.shape
    x2d = x.transpose(0, 2, 1, 3).reshape(N, H, C * W).astype(jnp.bfloat16)
    out2d = s2block_forward_hwc(
        x2d, dw_weight, gamma, beta, running_mean, running_var,
        channels=C, height=H, width=W, kernel_size=kernel_size, eps=eps,
        out_dtype=x.dtype)
    return out2d.reshape(N, H, C, W).transpose(0, 2, 1, 3)


# ---------------------------------------------------------------------------
# Pure-JAX reference (independent formulation) for a correctness check.
# ---------------------------------------------------------------------------
def _upsample_ref(z, out_h, out_w):
    Ho, Wo = z.shape[-2], z.shape[-1]
    i0h, i1h, w0h, w1h = _bilinear_weights(out_h, Ho)
    i0w, i1w, w0w, w1w = _bilinear_weights(out_w, Wo)
    zh = z[..., i0h, :] * w0h[:, None] + z[..., i1h, :] * w1h[:, None]
    return zh[..., i0w] * w0w + zh[..., i1w] * w1w


def s2block_ref(x, dw_weight, gamma, beta, running_mean, running_var,
                kernel_size, eps=1e-5):
    N, C, H, W = x.shape
    k = int(kernel_size)
    p = k // 2
    Ho = (H + 2 * p - k) // k + 1
    Wo = (W + 2 * p - k) // k + 1
    w = dw_weight.reshape(C, 3, 3)

    xp = jnp.pad(x, ((0, 0), (0, 0), (p, p), (p, p)))[:, :, :Ho * k, :Wo * k]
    pooled = xp.reshape(N, C, Ho, k, Wo, k).mean(axis=(3, 5))

    yp = jnp.pad(pooled, ((0, 0), (0, 0), (1, 1), (1, 1)))
    conv = jnp.zeros((N, C, Ho, Wo), jnp.float32)
    for dh in range(3):
        for dw_ in range(3):
            conv = conv + (w[:, dh, dw_][None, :, None, None]
                           * yp[:, :, dh:dh + Ho, dw_:dw_ + Wo])

    scale = gamma / jnp.sqrt(running_var + eps)
    shift = beta - running_mean * scale
    y = jnp.maximum(conv * scale[None, :, None, None]
                    + shift[None, :, None, None], 0.0)
    return _upsample_ref(y, H, W)


# ---------------------------------------------------------------------------
if __name__ == "__main__":
    N, C, H, W = 2, 8, 16, 16
    ksize = 4   # S2Block(channels=8, kernel_size=4): pooled spatial size = 5x5

    key = jax.random.PRNGKey(0)
    k1, k2, k3, k4, k5, k6 = jax.random.split(key, 6)
    x = jax.random.normal(k1, (N, C, H, W), jnp.float32)
    dw_weight = 0.3 * jax.random.normal(k2, (C, 1, 3, 3), jnp.float32)   # groups=C, no bias
    gamma = 1.0 + 0.1 * jax.random.normal(k3, (C,), jnp.float32)
    beta = 0.1 * jax.random.normal(k4, (C,), jnp.float32)
    running_mean = 0.1 * jax.random.normal(k5, (C,), jnp.float32)
    running_var = jnp.abs(1.0 + 0.1 * jax.random.normal(k6, (C,), jnp.float32))

    out = s2block_forward(x, dw_weight, gamma, beta, running_mean, running_var,
                          kernel_size=ksize)
    out = jax.block_until_ready(out)

    ref = s2block_ref(x, dw_weight, gamma, beta, running_mean, running_var, ksize)
    # bf16 MXU operands -> slightly looser tolerance than pure-f32.
    np.testing.assert_allclose(np.asarray(out), np.asarray(ref), rtol=2e-2, atol=2e-2)

    print("KERNEL_OK")
</pallas_src>

<mosaic_0001>
module attributes {stable_mosaic.version = 11 : i64} {
  func.func @_s2block_kernel(%arg0: i32, %arg1: i32, %arg2: memref<1x16x128xbf16, #tpu.memory_space<vmem>>, %arg3: memref<7x16xbf16, #tpu.memory_space<vmem>>, %arg4: memref<3x128x40xbf16, #tpu.memory_space<vmem>>, %arg5: memref<16x5xbf16, #tpu.memory_space<vmem>>, %arg6: memref<40x128xbf16, #tpu.memory_space<vmem>>, %arg7: memref<1x10x40xf32, #tpu.memory_space<vmem>>, %arg8: memref<1x16x128xf32, #tpu.memory_space<vmem>>) attributes {dimension_semantics = [#tpu.dimension_semantics<parallel>, #tpu.dimension_semantics<parallel>], iteration_bounds = array<i64: 2, 1>, scalar_prefetch = 0 : i64, scratch_operands = 0 : i64, tpu.core_type = #tpu.core_type<tc>, window_params = [{transform_indices = @transform_0, window_bounds = array<i64: 1, 16, 128>}, {pipeline_mode = #tpu.pipeline_mode<synchronous>, transform_indices = @transform_1, window_bounds = array<i64: 7, 16>}, {pipeline_mode = #tpu.pipeline_mode<synchronous>, transform_indices = @transform_2, window_bounds = array<i64: 3, 128, 40>}, {pipeline_mode = #tpu.pipeline_mode<synchronous>, transform_indices = @transform_3, window_bounds = array<i64: 16, 5>}, {pipeline_mode = #tpu.pipeline_mode<synchronous>, transform_indices = @transform_4, window_bounds = array<i64: 40, 128>}, {transform_indices = @transform_5, window_bounds = array<i64: 1, 10, 40>}, {transform_indices = @transform_6, window_bounds = array<i64: 1, 16, 128>}]} {
    %c0 = arith.constant 0 : index
    %c0_0 = arith.constant 0 : index
    %0 = vector.load %arg3[%c0, %c0_0] : memref<7x16xbf16, #tpu.memory_space<vmem>>, vector<7x16xbf16>
    %c0_1 = arith.constant 0 : index
    %c0_2 = arith.constant 0 : index
    %1 = vector.load %arg5[%c0_1, %c0_2] : memref<16x5xbf16, #tpu.memory_space<vmem>>, vector<16x5xbf16>
    %c0_3 = arith.constant 0 : index
    %c0_4 = arith.constant 0 : index
    %2 = vector.load %arg6[%c0_3, %c0_4] : memref<40x128xbf16, #tpu.memory_space<vmem>>, vector<40x128xbf16>
    %c0_5 = arith.constant 0 : index
    %c0_6 = arith.constant 0 : index
    %c0_7 = arith.constant 0 : index
    %3 = vector.load %arg7[%c0_5, %c0_6, %c0_7] : memref<1x10x40xf32, #tpu.memory_space<vmem>>, vector<1x10x40xf32>
    %4 = vector.shape_cast %3 : vector<1x10x40xf32> to vector<10x40xf32>
    %5 = vector.extract_strided_slice %4 {offsets = [0, 0], sizes = [1, 40], strides = [1, 1]} : vector<10x40xf32> to vector<1x40xf32>
    %6 = vector.shape_cast %5 : vector<1x40xf32> to vector<40xf32>
    %7 = vector.extract_strided_slice %4 {offsets = [1, 0], sizes = [1, 40], strides = [1, 1]} : vector<10x40xf32> to vector<1x40xf32>
    %8 = vector.shape_cast %7 : vector<1x40xf32> to vector<40xf32>
    %9 = vector.extract_strided_slice %4 {offsets = [2, 0], sizes = [1, 40], strides = [1, 1]} : vector<10x40xf32> to vector<1x40xf32>
    %10 = vector.shape_cast %9 : vector<1x40xf32> to vector<40xf32>
    %11 = vector.extract_strided_slice %4 {offsets = [3, 0], sizes = [1, 40], strides = [1, 1]} : vector<10x40xf32> to vector<1x40xf32>
    %12 = vector.shape_cast %11 : vector<1x40xf32> to vector<40xf32>
    %13 = vector.extract_strided_slice %4 {offsets = [4, 0], sizes = [1, 40], strides = [1, 1]} : vector<10x40xf32> to vector<1x40xf32>
    %14 = vector.shape_cast %13 : vector<1x40xf32> to vector<40xf32>
    %15 = vector.extract_strided_slice %4 {offsets = [5, 0], sizes = [1, 40], strides = [1, 1]} : vector<10x40xf32> to vector<1x40xf32>
    %16 = vector.shape_cast %15 : vector<1x40xf32> to vector<40xf32>
    %17 = vector.extract_strided_slice %4 {offsets = [6, 0], sizes = [1, 40], strides = [1, 1]} : vector<10x40xf32> to vector<1x40xf32>
    %18 = vector.shape_cast %17 : vector<1x40xf32> to vector<40xf32>
    %19 = vector.extract_strided_slice %4 {offsets = [7, 0], sizes = [1, 40], strides = [1, 1]} : vector<10x40xf32> to vector<1x40xf32>
    %20 = vector.shape_cast %19 : vector<1x40xf32> to vector<40xf32>
    %21 = vector.extract_strided_slice %4 {offsets = [8, 0], sizes = [1, 40], strides = [1, 1]} : vector<10x40xf32> to vector<1x40xf32>
    %22 = vector.shape_cast %21 : vector<1x40xf32> to vector<40xf32>
    %23 = vector.extract_strided_slice %4 {offsets = [9, 0], sizes = [1, 40], strides = [1, 1]} : vector<10x40xf32> to vector<1x40xf32>
    %24 = vector.shape_cast %23 : vector<1x40xf32> to vector<40xf32>
    %c0_i32 = arith.constant 0 : i32
    %25 = arith.index_cast %c0_i32 : i32 to index
    %c0_8 = arith.constant 0 : index
    %c0_9 = arith.constant 0 : index
    %26 = vector.load %arg2[%25, %c0_8, %c0_9] : memref<1x16x128xbf16, #tpu.memory_space<vmem>>, vector<1x16x128xbf16>
    %27 = vector.shape_cast %26 : vector<1x16x128xbf16> to vector<16x128xbf16>
    %cst = arith.constant dense<0.000000e+00> : vector<7x128xf32>
    %28 = tpu.matmul %0, %27, %cst {dimension_numbers = #tpu.dot_dimension_numbers<[1], [0], [0], [1], [0, 0, 1, 1], [], []>} : vector<7x16xbf16>, vector<16x128xbf16>, vector<7x128xf32> -> vector<7x128xf32>
    %29 = arith.truncf %28 : vector<7x128xf32> to vector<7x128xbf16>
    %cst_10 = arith.constant 0.000000e+00 : f32
    %30 = vector.broadcast %cst_10 : f32 to vector<5x40xf32>
    %c0_11 = arith.constant 0 : index
    %c0_12 = arith.constant 0 : index
    %c0_13 = arith.constant 0 : index
    %31 = vector.load %arg4[%c0_11, %c0_12, %c0_13] : memref<3x128x40xbf16, #tpu.memory_space<vmem>>, vector<1x128x40xbf16>
    %32 = vector.shape_cast %31 : vector<1x128x40xbf16> to vector<128x40xbf16>
    %cst_14 = arith.constant dense<0.000000e+00> : vector<7x40xf32>
    %33 = tpu.matmul %29, %32, %cst_14 {dimension_numbers = #tpu.dot_dimension_numbers<[1], [0], [0], [1], [0, 0, 1, 1], [], []>} : vector<7x128xbf16>, vector<128x40xbf16>, vector<7x40xf32> -> vector<7x40xf32>
    %34 = vector.extract_strided_slice %33 {offsets = [0, 0], sizes = [5, 40], strides = [1, 1]} : vector<7x40xf32> to vector<5x40xf32>
    %35 = vector.shape_cast %6 : vector<40xf32> to vector<1x40xf32>
    %36 = vector.broadcast %35 : vector<1x40xf32> to vector<5x40xf32>
    %37 = arith.mulf %34, %36 : vector<5x40xf32>
    %38 = arith.addf %30, %37 : vector<5x40xf32>
    %39 = vector.extract_strided_slice %33 {offsets = [1, 0], sizes = [5, 40], strides = [1, 1]} : vector<7x40xf32> to vector<5x40xf32>
    %40 = vector.shape_cast %12 : vector<40xf32> to vector<1x40xf32>
    %41 = vector.broadcast %40 : vector<1x40xf32> to vector<5x40xf32>
    %42 = arith.mulf %39, %41 : vector<5x40xf32>
    %43 = arith.addf %38, %42 : vector<5x40xf32>
    %44 = vector.extract_strided_slice %33 {offsets = [2, 0], sizes = [5, 40], strides = [1, 1]} : vector<7x40xf32> to vector<5x40xf32>
    %45 = vector.shape_cast %18 : vector<40xf32> to vector<1x40xf32>
    %46 = vector.broadcast %45 : vector<1x40xf32> to vector<5x40xf32>
    %47 = arith.mulf %44, %46 : vector<5x40xf32>
    %48 = arith.addf %43, %47 : vector<5x40xf32>
    %c1 = arith.constant 1 : index
    %c0_15 = arith.constant 0 : index
    %c0_16 = arith.constant 0 : index
    %49 = vector.load %arg4[%c1, %c0_15, %c0_16] : memref<3x128x40xbf16, #tpu.memory_space<vmem>>, vector<1x128x40xbf16>
    %50 = vector.shape_cast %49 : vector<1x128x40xbf16> to vector<128x40xbf16>
    %cst_17 = arith.constant dense<0.000000e+00> : vector<7x40xf32>
    %51 = tpu.matmul %29, %50, %cst_17 {dimension_numbers = #tpu.dot_dimension_numbers<[1], [0], [0], [1], [0, 0, 1, 1], [], []>} : vector<7x128xbf16>, vector<128x40xbf16>, vector<7x40xf32> -> vector<7x40xf32>
    %52 = vector.extract_strided_slice %51 {offsets = [0, 0], sizes = [5, 40], strides = [1, 1]} : vector<7x40xf32> to vector<5x40xf32>
    %53 = vector.shape_cast %8 : vector<40xf32> to vector<1x40xf32>
    %54 = vector.broadcast %53 : vector<1x40xf32> to vector<5x40xf32>
    %55 = arith.mulf %52, %54 : vector<5x40xf32>
    %56 = arith.addf %48, %55 : vector<5x40xf32>
    %57 = vector.extract_strided_slice %51 {offsets = [1, 0], sizes = [5, 40], strides = [1, 1]} : vector<7x40xf32> to vector<5x40xf32>
    %58 = vector.shape_cast %14 : vector<40xf32> to vector<1x40xf32>
    %59 = vector.broadcast %58 : vector<1x40xf32> to vector<5x40xf32>
    %60 = arith.mulf %57, %59 : vector<5x40xf32>
    %61 = arith.addf %56, %60 : vector<5x40xf32>
    %62 = vector.extract_strided_slice %51 {offsets = [2, 0], sizes = [5, 40], strides = [1, 1]} : vector<7x40xf32> to vector<5x40xf32>
    %63 = vector.shape_cast %20 : vector<40xf32> to vector<1x40xf32>
    %64 = vector.broadcast %63 : vector<1x40xf32> to vector<5x40xf32>
    %65 = arith.mulf %62, %64 : vector<5x40xf32>
    %66 = arith.addf %61, %65 : vector<5x40xf32>
    %c2 = arith.constant 2 : index
    %c0_18 = arith.constant 0 : index
    %c0_19 = arith.constant 0 : index
    %67 = vector.load %arg4[%c2, %c0_18, %c0_19] : memref<3x128x40xbf16, #tpu.memory_space<vmem>>, vector<1x128x40xbf16>
    %68 = vector.shape_cast %67 : vector<1x128x40xbf16> to vector<128x40xbf16>
    %cst_20 = arith.constant dense<0.000000e+00> : vector<7x40xf32>
    %69 = tpu.matmul %29, %68, %cst_20 {dimension_numbers = #tpu.dot_dimension_numbers<[1], [0], [0], [1], [0, 0, 1, 1], [], []>} : vector<7x128xbf16>, vector<128x40xbf16>, vector<7x40xf32> -> vector<7x40xf32>
    %70 = vector.extract_strided_slice %69 {offsets = [0, 0], sizes = [5, 40], strides = [1, 1]} : vector<7x40xf32> to vector<5x40xf32>
    %71 = vector.shape_cast %10 : vector<40xf32> to vector<1x40xf32>
    %72 = vector.broadcast %71 : vector<1x40xf32> to vector<5x40xf32>
    %73 = arith.mulf %70, %72 : vector<5x40xf32>
    %74 = arith.addf %66, %73 : vector<5x40xf32>
    %75 = vector.extract_strided_slice %69 {offsets = [1, 0], sizes = [5, 40], strides = [1, 1]} : vector<7x40xf32> to vector<5x40xf32>
    %76 = vector.shape_cast %16 : vector<40xf32> to vector<1x40xf32>
    %77 = vector.broadcast %76 : vector<1x40xf32> to vector<5x40xf32>
    %78 = arith.mulf %75, %77 : vector<5x40xf32>
    %79 = arith.addf %74, %78 : vector<5x40xf32>
    %80 = vector.extract_strided_slice %69 {offsets = [2, 0], sizes = [5, 40], strides = [1, 1]} : vector<7x40xf32> to vector<5x40xf32>
    %81 = vector.shape_cast %22 : vector<40xf32> to vector<1x40xf32>
    %82 = vector.broadcast %81 : vector<1x40xf32> to vector<5x40xf32>
    %83 = arith.mulf %80, %82 : vector<5x40xf32>
    %84 = arith.addf %79, %83 : vector<5x40xf32>
    %85 = vector.shape_cast %24 : vector<40xf32> to vector<1x40xf32>
    %86 = vector.broadcast %85 : vector<1x40xf32> to vector<5x40xf32>
    %87 = arith.addf %84, %86 : vector<5x40xf32>
    %cst_21 = arith.constant 0.000000e+00 : f32
    %88 = vector.broadcast %cst_21 : f32 to vector<5x40xf32>
    %89 = arith.maximumf %87, %88 : vector<5x40xf32>
    %90 = arith.truncf %89 : vector<5x40xf32> to vector<5x40xbf16>
    %cst_22 = arith.constant dense<0.000000e+00> : vector<5x128xf32>
    %91 = tpu.matmul %90, %2, %cst_22 {dimension_numbers = #tpu.dot_dimension_numbers<[1], [0], [0], [1], [0, 0, 1, 1], [], []>} : vector<5x40xbf16>, vector<40x128xbf16>, vector<5x128xf32> -> vector<5x128xf32>
    %92 = arith.truncf %91 : vector<5x128xf32> to vector<5x128xbf16>
    %cst_23 = arith.constant dense<0.000000e+00> : vector<16x128xf32>
    %93 = tpu.matmul %1, %92, %cst_23 {dimension_numbers = #tpu.dot_dimension_numbers<[1], [0], [0], [1], [0, 0, 1, 1], [], []>} : vector<16x5xbf16>, vector<5x128xbf16>, vector<16x128xf32> -> vector<16x128xf32>
    %94 = arith.index_cast %c0_i32 : i32 to index
    %c0_24 = arith.constant 0 : index
    %c0_25 = arith.constant 0 : index
    %95 = vector.load %arg8[%94, %c0_24, %c0_25] : memref<1x16x128xf32, #tpu.memory_space<vmem>>, vector<1x16x128xf32>
    %96 = vector.shape_cast %95 : vector<1x16x128xf32> to vector<16x128xf32>
    %97 = vector.shape_cast %93 : vector<16x128xf32> to vector<1x16x128xf32>
    tpu.vector_store %arg8[%94, %c0_24, %c0_25], %97 {strides = array<i32>} : memref<1x16x128xf32, #tpu.memory_space<vmem>>, vector<1x16x128xf32>,
    %c1_i32 = arith.constant 1 : i32
    return
  }
  func.func @transform_0(%arg0: i32, %arg1: i32) -> (i32, i32, i32) {
    %c0_i32 = arith.constant 0 : i32
    %c0_i32_0 = arith.constant 0 : i32
    return %arg0, %c0_i32, %arg1 : i32, i32, i32
  }
  func.func @transform_1(%arg0: i32, %arg1: i32) -> (i32, i32) {
    %c0_i32 = arith.constant 0 : i32
    %c0_i32_0 = arith.constant 0 : i32
    %c0_i32_1 = arith.constant 0 : i32
    return %c0_i32, %c0_i32_0 : i32, i32
  }
  func.func @transform_2(%arg0: i32, %arg1: i32) -> (i32, i32, i32) {
    %c0_i32 = arith.constant 0 : i32
    %c0_i32_0 = arith.constant 0 : i32
    %c0_i32_1 = arith.constant 0 : i32
    %c0_i32_2 = arith.constant 0 : i32
    return %c0_i32, %c0_i32_0, %c0_i32_1 : i32, i32, i32
  }
  func.func @transform_3(%arg0: i32, %arg1: i32) -> (i32, i32) {
    %c0_i32 = arith.constant 0 : i32
    %c0_i32_0 = arith.constant 0 : i32
    %c0_i32_1 = arith.constant 0 : i32
    return %c0_i32, %c0_i32_0 : i32, i32
  }
  func.func @transform_4(%arg0: i32, %arg1: i32) -> (i32, i32) {
    %c0_i32 = arith.constant 0 : i32
    %c0_i32_0 = arith.constant 0 : i32
    %c0_i32_1 = arith.constant 0 : i32
    return %c0_i32, %c0_i32_0 : i32, i32
  }
  func.func @transform_5(%arg0: i32, %arg1: i32) -> (i32, i32, i32) {
    %c0_i32 = arith.constant 0 : i32
    %c0_i32_0 = arith.constant 0 : i32
    %c0_i32_1 = arith.constant 0 : i32
    return %arg1, %c0_i32, %c0_i32_0 : i32, i32, i32
  }
  func.func @transform_6(%arg0: i32, %arg1: i32) -> (i32, i32, i32) {
    %c0_i32 = arith.constant 0 : i32
    %c0_i32_0 = arith.constant 0 : i32
    return %arg0, %c0_i32, %arg1 : i32, i32, i32
  }
}

</mosaic_0001>

<llo_original>
// kernel: s2block_forward.1
$region0: #{s2block_forward.1}
  #allocation0 [shape = 'u32[]', space=smem, size = 0x4, offset = 0x4, fixed_abs, tag = 'smem constant byte address 0x4 - core index']
  #allocation1 [shape = 'u32[144,128]{1,0:T(1,128)}', space=vmem, size = 0x12000, scoped, tag = 'internal scratch']
  %s0 = inlined_call_operand.vmem [shape: bf16[2,16,128], index: 0, kind: input, shape index: {}]
  %s1 = inlined_call_operand.vmem [shape: bf16[7,16], index: 1, kind: input, shape index: {}]
  %s2 = inlined_call_operand.vmem [shape: bf16[3,128,40], index: 2, kind: input, shape index: {}]
  %s3 = inlined_call_operand.vmem [shape: bf16[16,5], index: 3, kind: input, shape index: {}]
  %s4 = inlined_call_operand.vmem [shape: bf16[40,128], index: 4, kind: input, shape index: {}]
  %s5 = inlined_call_operand.vmem [shape: f32[1,10,40], index: 5, kind: input, shape index: {}]
  %s6 = inlined_call_operand.vmem [shape: f32[2,16,128], index: 6, kind: output, shape index: {}]
  %s7 = sld [smem:[#allocation0]]
  $region57: #{s2block_forward.1} parent=0
    _
  %s9 = ssub.s32 1, %s7
  %s10 = scalar_select 0, %s9, %s7
  loop: start=0, step=1, limit=4
  $region2: #{s2block_forward.1} parent=0 // loop_pre_header
    _
  $region3: #{s2block_forward.1} parent=0 // loop_header
    %s12 = sphi 0, %s16
    %p13 = scmp.ge.s32.totalorder %s12, 4
    %s19 = sphi 0, %s31
    %s20 = sphi 0, %s27
    %s21 = sphi 0, %s19
    %s22 = sphi 0, %s20
    %s23 = sphi 0, %s21
    %s24 = sphi 0, %s22
    %s36 = sphi 0, %s38
    %s39 = sphi 0, %s36
    %s40 = sphi 0, %s39
    %s56 = sphi 0, %s40
    %s60 = sphi 0, %s60
    %s62 = sphi 0, %s60
    %s63 = sphi 0, %s62
    %s77 = sphi 0, %s63
    %s81 = sphi 0, %s81
    %s83 = sphi 0, %s81
    %s84 = sphi 0, %s83
    %s98 = sphi 0, %s84
    %s102 = sphi 0, %s102
    %s104 = sphi 0, %s102
    %s105 = sphi 0, %s104
    %s119 = sphi 0, %s105
    %s123 = sphi 0, %s123
    %s125 = sphi 0, %s123
    %s126 = sphi 0, %s125
    %s140 = sphi 0, %s126
    %s146 = sphi 0, %s148
    %s149 = sphi 0, %s146
    %s150 = sphi 0, %s149
    %s166 = sphi 0, %s150
    %s174 = sphi 0, %s176
    %s177 = sphi 0, %s174
    %s178 = sphi 0, %s177
    %s194 = sphi 0, %s178
  $region4: #{s2block_forward.1} parent=0 // loop_header_branch
    %15 = sbr.rel (%p13) target = $region8
  $region5: #{s2block_forward.1} parent=0 // loop_body
    %s17 = ssub.s32 %s12, 1
    %s18 = ssub.s32 %s12, 2
    %s25 = sadd.s32 1, %s20
    %p26 = scmp.ge.s32.totalorder %s25, 1
    %s27 = scalar_select %p26, 0, %s25
    %s28 = sadd.s32 1, %s19
    %s29 = scalar_select %p26, %s28, %s19
    %p30 = scmp.ge.s32.totalorder %s29, 2
    %s31 = scalar_select %p30, 0, %s29
    %s32 = ssub.s32 %s19, %s31
    %s33 = ssub.s32 %s20, %s27
    %s34 = sor.u32 %s32, %s33
    %p35 = scmp.eq.s32.totalorder %s34, 0
    %s37 = sadd.s32 %s36, 1
    %s38 = scalar_select %p35, %s36, %s37
    %p41 = pneg %p35
    %p42 = scmp.eq.s32.totalorder %s12, 1
    %p43 = por %p41, %p42
    %p44 = scmp.ne.s32.totalorder %s36, %s39
    %p45 = scmp.eq.s32.totalorder %s12, 0
    %p46 = por %p44, %p45
    %p47 = scmp.ne.s32.totalorder %s36, %s39
    %p48 = scmp.eq.s32.totalorder %s17, 1
    %p49 = por %p47, %p48
    %p50 = scmp.ne.s32.totalorder %s39, %s40
    %p51 = scmp.eq.s32.totalorder %s17, 0
    %p52 = por %p50, %p51
    %p53 = scmp.ne.s32.totalorder %s39, %s40
    %p54 = scmp.eq.s32.totalorder %s18, 1
    %p55 = por %p53, %p54
    %p57 = scmp.ne.s32.totalorder %s40, %s56
    %p58 = scmp.eq.s32.totalorder %s18, 0
    %p59 = por %p57, %p58
    %s61 = sadd.s32 %s60, 1
    %p64 = scmp.eq.s32.totalorder %s12, 1
    %p65 = scmp.ne.s32.totalorder %s60, %s62
    %p66 = scmp.eq.s32.totalorder %s12, 0
    %p67 = por %p65, %p66
    %p68 = scmp.ne.s32.totalorder %s60, %s62
    %p69 = scmp.eq.s32.totalorder %s17, 1
    %p70 = por %p68, %p69
    %p71 = scmp.ne.s32.totalorder %s62, %s63
    %p72 = scmp.eq.s32.totalorder %s17, 0
    %p73 = por %p71, %p72
    %p74 = scmp.ne.s32.totalorder %s62, %s63
    %p75 = scmp.eq.s32.totalorder %s18, 1
    %p76 = por %p74, %p75
    %p78 = scmp.ne.s32.totalorder %s63, %s77
    %p79 = scmp.eq.s32.totalorder %s18, 0
    %p80 = por %p78, %p79
    %s82 = sadd.s32 %s81, 1
    %p85 = scmp.eq.s32.totalorder %s12, 1
    %p86 = scmp.ne.s32.totalorder %s81, %s83
    %p87 = scmp.eq.s32.totalorder %s12, 0
    %p88 = por %p86, %p87
    %p89 = scmp.ne.s32.totalorder %s81, %s83
    %p90 = scmp.eq.s32.totalorder %s17, 1
    %p91 = por %p89, %p90
    %p92 = scmp.ne.s32.totalorder %s83, %s84
    %p93 = scmp.eq.s32.totalorder %s17, 0
    %p94 = por %p92, %p93
    %p95 = scmp.ne.s32.totalorder %s83, %s84
    %p96 = scmp.eq.s32.totalorder %s18, 1
    %p97 = por %p95, %p96
    %p99 = scmp.ne.s32.totalorder %s84, %s98
    %p100 = scmp.eq.s32.totalorder %s18, 0
    %p101 = por %p99, %p100
    %s103 = sadd.s32 %s102, 1
    %p106 = scmp.eq.s32.totalorder %s12, 1
    %p107 = scmp.ne.s32.totalorder %s102, %s104
    %p108 = scmp.eq.s32.totalorder %s12, 0
    %p109 = por %p107, %p108
    %p110 = scmp.ne.s32.totalorder %s102, %s104
    %p111 = scmp.eq.s32.totalorder %s17, 1
    %p112 = por %p110, %p111
    %p113 = scmp.ne.s32.totalorder %s104, %s105
    %p114 = scmp.eq.s32.totalorder %s17, 0
    %p115 = por %p113, %p114
    %p116 = scmp.ne.s32.totalorder %s104, %s105
    %p117 = scmp.eq.s32.totalorder %s18, 1
    %p118 = por %p116, %p117
    %p120 = scmp.ne.s32.totalorder %s105, %s119
    %p121 = scmp.eq.s32.totalorder %s18, 0
    %p122 = por %p120, %p121
    %s124 = sadd.s32 %s123, 1
    %p127 = scmp.eq.s32.totalorder %s12, 1
    %p128 = scmp.ne.s32.totalorder %s123, %s125
    %p129 = scmp.eq.s32.totalorder %s12, 0
    %p130 = por %p128, %p129
    %p131 = scmp.ne.s32.totalorder %s123, %s125
    %p132 = scmp.eq.s32.totalorder %s17, 1
    %p133 = por %p131, %p132
    %p134 = scmp.ne.s32.totalorder %s125, %s126
    %p135 = scmp.eq.s32.totalorder %s17, 0
    %p136 = por %p134, %p135
    %p137 = scmp.ne.s32.totalorder %s125, %s126
    %p138 = scmp.eq.s32.totalorder %s18, 1
    %p139 = por %p137, %p138
    %p141 = scmp.ne.s32.totalorder %s126, %s140
    %p142 = scmp.eq.s32.totalorder %s18, 0
    %p143 = por %p141, %p142
    %s144 = ssub.s32 %s20, %s27
    %p145 = scmp.eq.s32.totalorder %s144, 0
    %s147 = sadd.s32 %s146, 1
    %s148 = scalar_select %p145, %s146, %s147
    %p151 = pneg %p145
    %p152 = scmp.eq.s32.totalorder %s12, 1
    %p153 = por %p151, %p152
    %p154 = scmp.ne.s32.totalorder %s146, %s149
    %p155 = scmp.eq.s32.totalorder %s12, 0
    %p156 = por %p154, %p155
    %p157 = scmp.ne.s32.totalorder %s146, %s149
    %p158 = scmp.eq.s32.totalorder %s17, 1
    %p159 = por %p157, %p158
    %p160 = scmp.ne.s32.totalorder %s149, %s150
    %p161 = scmp.eq.s32.totalorder %s17, 0
    %p162 = por %p160, %p161
    %p163 = scmp.ne.s32.totalorder %s149, %s150
    %p164 = scmp.eq.s32.totalorder %s18, 1
    %p165 = por %p163, %p164
    %p167 = scmp.ne.s32.totalorder %s150, %s166
    %p168 = scmp.eq.s32.totalorder %s18, 0
    %p169 = por %p167, %p168
    %s170 = ssub.s32 %s19, %s31
    %s171 = ssub.s32 %s20, %s27
    %s172 = sor.u32 %s170, %s171
    %p173 = scmp.eq.s32.totalorder %s172, 0
    %s175 = sadd.s32 %s174, 1
    %s176 = scalar_select %p173, %s174, %s175
    %p179 = pneg %p173
    %p180 = scmp.eq.s32.totalorder %s12, 1
    %p181 = por %p179, %p180
    %p182 = scmp.ne.s32.totalorder %s174, %s177
    %p183 = scmp.eq.s32.totalorder %s12, 0
    %p184 = por %p182, %p183
    %p185 = scmp.ne.s32.totalorder %s174, %s177
    %p186 = scmp.eq.s32.totalorder %s17, 1
    %p187 = por %p185, %p186
    %p188 = scmp.ne.s32.totalorder %s177, %s178
    %p189 = scmp.eq.s32.totalorder %s17, 0
    %p190 = por %p188, %p189
    %p191 = scmp.ne.s32.totalorder %s177, %s178
    %p192 = scmp.eq.s32.totalorder %s18, 1
    %p193 = por %p191, %p192
    %p195 = scmp.ne.s32.totalorder %s178, %s194
    %p196 = scmp.eq.s32.totalorder %s18, 0
    %p197 = por %p195, %p196
    %p198 = scmp.le.s32.totalorder 1, %s12
    %p199 = scmp.lt.s32.totalorder %s12, 3
    %p200 = pnand %p198, %p199
    %p201 = pneg %p200
    // Predicated region
    $region9: #{s2block_forward.1} parent=5 // pred_check
      _
    $region10: #{s2block_forward.1} parent=5 // pred_check_branch
      %203 = sbr.rel (%p200) target = $region12
    $region11: #{s2block_forward.1} parent=5 // pred_region
      %s204 = ssub.s32 %s12, 1
      // Predicated region
      $region13: #{s2block_forward.1} parent=11 // pred_check
        %p205 = pneg %p73
      $region14: #{s2block_forward.1} parent=11 // pred_check_branch
        %207 = sbr.rel (%p205) target = $region16
      $region15: #{s2block_forward.1} parent=11 // pred_region
        _
      $region16: #{s2block_forward.1} parent=11 // pred_fallthru
        _
      // Predicated region
      $region17: #{s2block_forward.1} parent=11 // pred_check
        %p208 = pneg %p94
      $region18: #{s2block_forward.1} parent=11 // pred_check_branch
        %210 = sbr.rel (%p208) target = $region20
      $region19: #{s2block_forward.1} parent=11 // pred_region
        _
      $region20: #{s2block_forward.1} parent=11 // pred_fallthru
        _
      // Predicated region
      $region21: #{s2block_forward.1} parent=11 // pred_check
        %p211 = pneg %p115
      $region22: #{s2block_forward.1} parent=11 // pred_check_branch
        %213 = sbr.rel (%p211) target = $region24
      $region23: #{s2block_forward.1} parent=11 // pred_region
        _
      $region24: #{s2block_forward.1} parent=11 // pred_fallthru
        _
      // Predicated region
      $region25: #{s2block_forward.1} parent=11 // pred_check
        %p214 = pneg %p136
      $region26: #{s2block_forward.1} parent=11 // pred_check_branch
        %216 = sbr.rel (%p214) target = $region28
      $region27: #{s2block_forward.1} parent=11 // pred_region
        _
      $region28: #{s2block_forward.1} parent=11 // pred_fallthru
        _
      // Predicated region
      $region29: #{s2block_forward.1} parent=11 // pred_check
        %p217 = pneg %p162
      $region30: #{s2block_forward.1} parent=11 // pred_check_branch
        %219 = sbr.rel (%p217) target = $region32
      $region31: #{s2block_forward.1} parent=11 // pred_region
        %p220 = scmp.lt.s32.totalorder %s22, 0
        %s221 = scalar_select %p220, %s22, 0
        %s222 = smul.addr %s221, 2
        %s223 = smul.addr %s222, 8
        %s224 = scalar_lea.vmem %s5, %s223
      $region32: #{s2block_forward.1} parent=11 // pred_fallthru
        _
    $region12: #{s2block_forward.1} parent=5 // pred_fallthru
      _
    %p225 = scmp.lt.s32.totalorder %s12, 2
    // Predicated region
    $region33: #{s2block_forward.1} parent=5 // pred_check
      %p226 = pneg %p225
    $region34: #{s2block_forward.1} parent=5 // pred_check_branch
      %228 = sbr.rel (%p226) target = $region36
    $region35: #{s2block_forward.1} parent=5 // pred_region
      // Predicated region
      $region37: #{s2block_forward.1} parent=35 // pred_check
        %p229 = pneg %p46
      $region38: #{s2block_forward.1} parent=35 // pred_check_branch
        %231 = sbr.rel (%p229) target = $region40
      $region39: #{s2block_forward.1} parent=35 // pred_region
        %p232 = scmp.lt.s32.totalorder %s19, 1
        %s233 = scalar_select %p232, %s19, 1
        %p234 = scmp.lt.s32.totalorder %s20, 0
        %s235 = scalar_select %p234, %s20, 0
        %s236 = smul.addr %s233, 2
        %s237 = sadd.s32 %s235, %s236
        %s238 = smul.addr %s237, 4
        %s239 = scalar_lea.vmem %s0, %s238
      $region40: #{s2block_forward.1} parent=35 // pred_fallthru
        _
    $region36: #{s2block_forward.1} parent=5 // pred_fallthru
      _
    %p240 = scmp.le.s32.totalorder 1, %s12
    %p241 = scmp.lt.s32.totalorder %s12, 3
    %p242 = pnand %p240, %p241
    %p243 = pneg %p242
    // Predicated region
    $region41: #{s2block_forward.1} parent=5 // pred_check
      _
    $region42: #{s2block_forward.1} parent=5 // pred_check_branch
      %245 = sbr.rel (%p242) target = $region44
    $region43: #{s2block_forward.1} parent=5 // pred_region
      %s246 = ssub.s32 %s12, 1
      %p247 = scmp.lt.s32.totalorder %s21, 1
      %s248 = scalar_select %p247, %s21, 1
      %p249 = scmp.lt.s32.totalorder %s22, 0
      %s250 = scalar_select %p249, %s22, 0
      %s251 = smul.addr %s248, 2
      %s252 = sadd.s32 %s250, %s251
      %s253 = smul.addr %s252, 4
      %s254 = scalar_lea.vmem %s0, %s253
      %p255 = pneg %p52
      %p256 = pneg %p49
      %p257 = pneg %p73
      %p258 = pneg %p70
      %p259 = pneg %p94
      %p260 = pneg %p91
      %p261 = pneg %p115
      %p262 = pneg %p112
      %p263 = pneg %p136
      %p264 = pneg %p133
      %p265 = scmp.lt.s32.totalorder %s22, 0
      %s266 = scalar_select %p265, %s22, 0
      %s267 = smul.addr %s266, 2
      %s268 = smul.addr %s267, 8
      %s269 = scalar_lea.vmem %s5, %s268
      %p270 = pneg %p162
      %p271 = pneg %p159
      %p272 = pneg %p190
      %p273 = pneg %p187
      %p274 = scmp.lt.s32.totalorder %s21, 1
      %s275 = scalar_select %p274, %s21, 1
      %p276 = scmp.lt.s32.totalorder %s22, 0
      %s277 = scalar_select %p276, %s22, 0
      %s278 = smul.addr %s275, 2
      %s279 = sadd.s32 %s277, %s278
      %s280 = smul.addr %s279, 8
      %s281 = scalar_lea.vmem %s6, %s280
      %p282 = scmp.lt.s32.totalorder %s21, 1
      %s283 = scalar_select %p282, %s21, 1
      %p284 = scmp.lt.s32.totalorder %s22, 0
      %s285 = scalar_select %p284, %s22, 0
      %s286 = smul.addr %s283, 2
      %s287 = sadd.s32 %s285, %s286
      %s288 = smul.addr %s287, 4
      %s289 = scalar_lea.vmem %s0, %s288
      %p290 = scmp.lt.s32.totalorder %s22, 0
      %s291 = scalar_select %p290, %s22, 0
      %s292 = smul.addr %s291, 2
      %s293 = smul.addr %s292, 8
      %s294 = scalar_lea.vmem %s5, %s293
      %p295 = scmp.lt.s32.totalorder %s21, 1
      %s296 = scalar_select %p295, %s21, 1
      %p297 = scmp.lt.s32.totalorder %s22, 0
      %s298 = scalar_select %p297, %s22, 0
      %s299 = smul.addr %s296, 2
      %s300 = sadd.s32 %s298, %s299
      %s301 = smul.addr %s300, 8
      %s302 = scalar_lea.vmem %s6, %s301
      %v304 = vld [vmem:[%s1] sm:$0xf]
      %v305 = vld [vmem:[%s3] sm:$0xf]
      %v306 = vld [vmem:[%s3 + $0x4] sm:$0xf]
      %v307 = vld [vmem:[%s4] sm:$0xf]
      %v308 = vld [vmem:[%s4 + $0x4] sm:$0xf]
      %v309 = vld [vmem:[%s4 + $0x8] sm:$0xf]
      %v310 = vld [vmem:[%s4 + $0xc] sm:$0xf]
      %v311 = vld [vmem:[%s4 + $0x10] sm:$0xf]
      %v312 = vld [vmem:[%s294] sm:$0xff]
      %v313 = vld [vmem:[%s294 + $0x8] sm:$0x3]
      %v314 = vld [vmem:[%s289] sm:$0xf]
      %v315 = vld [vmem:[%s289 + $0x4] sm:$0xf]
      %v318 = vunpack.c.l.b16 %v314
      %v319 = vunpack.c.l.b16 %v315
      %v320 = vpack.c.b16 %v319, %v318
      %vm322 = vcmask 130048
      %v324 = vsel %vm322, %v304, 0
      %326 = vmatprep.subr.bf16.mxu0 0
      %327 = vmatpush1.bf16.msra.mxu0 %v320
      %328 = vmatprep.subr.bf16.mxu0 0
      %329 = vmatpush1.bf16.msra.mxu0 0
      %330 = vmatprep.subr.bf16.mxu0 0
      %331 = vmatpush1.bf16.msra.mxu0 0
      %332 = vmatprep.subr.bf16.mxu0 0
      %333 = vmatpush1.bf16.msra.mxu0 0
      %334 = vmatprep.subr.bf16.mxu0 0
      %335 = vmatpush1.bf16.msra.mxu0 0
      %336 = vmatprep.subr.bf16.mxu0 0
      %337 = vmatpush1.bf16.msra.mxu0 0
      %338 = vmatprep.subr.bf16.mxu0 0
      %339 = vmatpush1.bf16.msra.mxu0 0
      %340 = vmatprep.subr.bf16.mxu0 0
      %341 = vmatpush1.bf16.msra.mxu0 0
      %342 = vmatprep.subr.bf16.mxu0 0
      %343 = vmatpush1.bf16.msra.mxu0 0
      %344 = vmatprep.subr.bf16.mxu0 0
      %345 = vmatpush1.bf16.msra.mxu0 0
      %346 = vmatprep.subr.bf16.mxu0 0
      %347 = vmatpush1.bf16.msra.mxu0 0
      %348 = vmatprep.subr.bf16.mxu0 0
      %349 = vmatpush1.bf16.msra.mxu0 0
      %350 = vmatprep.subr.bf16.mxu0 0
      %351 = vmatpush1.bf16.msra.mxu0 0
      %352 = vmatprep.subr.bf16.mxu0 0
      %353 = vmatpush1.bf16.msra.mxu0 0
      %354 = vmatprep.subr.bf16.mxu0 0
      %355 = vmatpush1.bf16.msra.mxu0 0
      %356 = vmatprep.subr.bf16.mxu0 0
      %357 = vmatpush1.bf16.msra.mxu0 0
      %358 = vmatprep.mubr.bf16.mxu0 0
      %359 = vmatmul.mubr.bf16.gmra.mrb[0].mxu0 %v324
      %v360 = vpop.f32.mrb[0].mxu0
      %v361 = vadd.f32 0.0, %v360
      %v362 = vpop.f32.mrb[0].mxu0
      %v363 = vpop.f32.mrb[0].mxu0
      %v364 = vpop.f32.mrb[0].mxu0
      %365 = vdwg.mxu0
      %v366 = vpack.c.bf16 %v361, %v361
      %v367 = vld [vmem:[%s2] sm:$0xf]
      %v368 = vld [vmem:[%s2 + $0x4] sm:$0xf]
      %v369 = vld [vmem:[%s2 + $0x8] sm:$0xf]
      %v370 = vld [vmem:[%s2 + $0xc] sm:$0xf]
      %v371 = vld [vmem:[%s2 + $0x10] sm:$0xf]
      %v372 = vld [vmem:[%s2 + $0x14] sm:$0xf]
      %v373 = vld [vmem:[%s2 + $0x18] sm:$0xf]
      %v374 = vld [vmem:[%s2 + $0x1c] sm:$0xf]
      %v375 = vld [vmem:[%s2 + $0x20] sm:$0xf]
      %v376 = vld [vmem:[%s2 + $0x24] sm:$0xf]
      %v377 = vld [vmem:[%s2 + $0x28] sm:$0xf]
      %v378 = vld [vmem:[%s2 + $0x2c] sm:$0xf]
      %v379 = vld [vmem:[%s2 + $0x30] sm:$0xf]
      %v380 = vld [vmem:[%s2 + $0x34] sm:$0xf]
      %v381 = vld [vmem:[%s2 + $0x38] sm:$0xf]
      %v382 = vld [vmem:[%s2 + $0x3c] sm:$0xf]
      %v399 = vunpack.c.l.b16 %v367
      %v400 = vunpack.c.l.b16 %v368
      %v401 = vunpack.c.l.b16 %v369
      %v402 = vunpack.c.l.b16 %v370
      %v403 = vunpack.c.l.b16 %v371
      %v404 = vunpack.c.l.b16 %v372
      %v405 = vunpack.c.l.b16 %v373
      %v406 = vunpack.c.l.b16 %v374
      %v407 = vunpack.c.l.b16 %v375
      %v408 = vunpack.c.l.b16 %v376
      %v409 = vunpack.c.l.b16 %v377
      %v410 = vunpack.c.l.b16 %v378
      %v411 = vunpack.c.l.b16 %v379
      %v412 = vunpack.c.l.b16 %v380
      %v413 = vunpack.c.l.b16 %v381
      %v414 = vunpack.c.l.b16 %v382
      %v415 = vpack.c.b16 %v400, %v399
      %v416 = vpack.c.b16 %v402, %v401
      %v417 = vpack.c.b16 %v404, %v403
      %v418 = vpack.c.b16 %v406, %v405
      %v419 = vpack.c.b16 %v408, %v407
      %v420 = vpack.c.b16 %v410, %v409
      %v421 = vpack.c.b16 %v412, %v411
      %v422 = vpack.c.b16 %v414, %v413
      %431 = vmatprep.subr.bf16.mxu0 0
      %432 = vmatpush1.bf16.msra.mxu0 %v415
      %433 = vmatprep.subr.bf16.mxu0 0
      %434 = vmatpush1.bf16.msra.mxu0 %v416
      %435 = vmatprep.subr.bf16.mxu0 0
      %436 = vmatpush1.bf16.msra.mxu0 %v417
      %437 = vmatprep.subr.bf16.mxu0 0
      %438 = vmatpush1.bf16.msra.mxu0 %v418
      %439 = vmatprep.subr.bf16.mxu0 0
      %440 = vmatpush1.bf16.msra.mxu0 %v419
      %441 = vmatprep.subr.bf16.mxu0 0
      %442 = vmatpush1.bf16.msra.mxu0 %v420
      %443 = vmatprep.subr.bf16.mxu0 0
      %444 = vmatpush1.bf16.msra.mxu0 %v421
      %445 = vmatprep.subr.bf16.mxu0 0
      %446 = vmatpush1.bf16.msra.mxu0 %v422
      %447 = vmatprep.subr.bf16.mxu0 0
      %448 = vmatpush1.bf16.msra.mxu0 0
      %449 = vmatprep.subr.bf16.mxu0 0
      %450 = vmatpush1.bf16.msra.mxu0 0
      %451 = vmatprep.subr.bf16.mxu0 0
      %452 = vmatpush1.bf16.msra.mxu0 0
      %453 = vmatprep.subr.bf16.mxu0 0
      %454 = vmatpush1.bf16.msra.mxu0 0
      %455 = vmatprep.subr.bf16.mxu0 0
      %456 = vmatpush1.bf16.msra.mxu0 0
      %457 = vmatprep.subr.bf16.mxu0 0
      %458 = vmatpush1.bf16.msra.mxu0 0
      %459 = vmatprep.subr.bf16.mxu0 0
      %460 = vmatpush1.bf16.msra.mxu0 0
      %461 = vmatprep.subr.bf16.mxu0 0
      %462 = vmatpush1.bf16.msra.mxu0 0
      %463 = vmatprep.mubr.bf16.mxu0 0
      %464 = vmatmul.mubr.bf16.gmra.mrb[0].mxu0 %v366
      %v465 = vpop.f32.mrb[0].mxu0
      %v466 = vadd.f32 0.0, %v465
      %v467 = vpop.f32.mrb[0].mxu0
      %v468 = vpop.f32.mrb[0].mxu0
      %v469 = vpop.f32.mrb[0].mxu0
      %470 = vdwg.mxu0
      %v471 = vlaneseq
      %v472 = vshrl.u32 %v471, 7
      %v473 = vsub.s32 0, %v472
      %v474 = vrot.slane %v312, %v473
      %v475 = vmul.f32 %v466, %v474
      %v476 = vadd.f32 %v475, 0.0
      %v477 = vlaneseq
      %v478 = vshrl.u32 %v477, 7
      %v479 = vsub.s32 3, %v478
      %v480 = vrot.slane %v312, %v479
      %v481 = vmul.f32 %v466, %v480
      %v483 = vrot.slane %v481, 1
      %v485 = vadd.f32 %v476, %v483
      %v486 = vlaneseq
      %v487 = vshrl.u32 %v486, 7
      %v488 = vsub.s32 6, %v487
      %v489 = vrot.slane %v312, %v488
      %v490 = vmul.f32 %v466, %v489
      %v492 = vrot.slane %v490, 2
      %v494 = vadd.f32 %v485, %v492
      %s495 = scalar_lea.vmem %s2, 64
      %v496 = vld [vmem:[%s495] sm:$0xf]
      %v497 = vld [vmem:[%s495 + $0x4] sm:$0xf]
      %v498 = vld [vmem:[%s495 + $0x8] sm:$0xf]
      %v499 = vld [vmem:[%s495 + $0xc] sm:$0xf]
      %v500 = vld [vmem:[%s495 + $0x10] sm:$0xf]
      %v501 = vld [vmem:[%s495 + $0x14] sm:$0xf]
      %v502 = vld [vmem:[%s495 + $0x18] sm:$0xf]
      %v503 = vld [vmem:[%s495 + $0x1c] sm:$0xf]
      %v504 = vld [vmem:[%s495 + $0x20] sm:$0xf]
      %v505 = vld [vmem:[%s495 + $0x24] sm:$0xf]
      %v506 = vld [vmem:[%s495 + $0x28] sm:$0xf]
      %v507 = vld [vmem:[%s495 + $0x2c] sm:$0xf]
      %v508 = vld [vmem:[%s495 + $0x30] sm:$0xf]
      %v509 = vld [vmem:[%s495 + $0x34] sm:$0xf]
      %v510 = vld [vmem:[%s495 + $0x38] sm:$0xf]
      %v511 = vld [vmem:[%s495 + $0x3c] sm:$0xf]
      %v528 = vunpack.c.l.b16 %v496
      %v529 = vunpack.c.l.b16 %v497
      %v530 = vunpack.c.l.b16 %v498
      %v531 = vunpack.c.l.b16 %v499
      %v532 = vunpack.c.l.b16 %v500
      %v533 = vunpack.c.l.b16 %v501
      %v534 = vunpack.c.l.b16 %v502
      %v535 = vunpack.c.l.b16 %v503
      %v536 = vunpack.c.l.b16 %v504
      %v537 = vunpack.c.l.b16 %v505
      %v538 = vunpack.c.l.b16 %v506
      %v539 = vunpack.c.l.b16 %v507
      %v540 = vunpack.c.l.b16 %v508
      %v541 = vunpack.c.l.b16 %v509
      %v542 = vunpack.c.l.b16 %v510
      %v543 = vunpack.c.l.b16 %v511
      %v544 = vpack.c.b16 %v529, %v528
      %v545 = vpack.c.b16 %v531, %v530
      %v546 = vpack.c.b16 %v533, %v532
      %v547 = vpack.c.b16 %v535, %v534
      %v548 = vpack.c.b16 %v537, %v536
      %v549 = vpack.c.b16 %v539, %v538
      %v550 = vpack.c.b16 %v541, %v540
      %v551 = vpack.c.b16 %v543, %v542
      %560 = vmatprep.subr.bf16.mxu0 0
      %561 = vmatpush1.bf16.msra.mxu0 %v544
      %562 = vmatprep.subr.bf16.mxu0 0
      %563 = vmatpush1.bf16.msra.mxu0 %v545
      %564 = vmatprep.subr.bf16.mxu0 0
      %565 = vmatpush1.bf16.msra.mxu0 %v546
      %566 = vmatprep.subr.bf16.mxu0 0
      %567 = vmatpush1.bf16.msra.mxu0 %v547
      %568 = vmatprep.subr.bf16.mxu0 0
      %569 = vmatpush1.bf16.msra.mxu0 %v548
      %570 = vmatprep.subr.bf16.mxu0 0
      %571 = vmatpush1.bf16.msra.mxu0 %v549
      %572 = vmatprep.subr.bf16.mxu0 0
      %573 = vmatpush1.bf16.msra.mxu0 %v550
      %574 = vmatprep.subr.bf16.mxu0 0
      %575 = vmatpush1.bf16.msra.mxu0 %v551
      %576 = vmatprep.subr.bf16.mxu0 0
      %577 = vmatpush1.bf16.msra.mxu0 0
      %578 = vmatprep.subr.bf16.mxu0 0
      %579 = vmatpush1.bf16.msra.mxu0 0
      %580 = vmatprep.subr.bf16.mxu0 0
      %581 = vmatpush1.bf16.msra.mxu0 0
      %582 = vmatprep.subr.bf16.mxu0 0
      %583 = vmatpush1.bf16.msra.mxu0 0
      %584 = vmatprep.subr.bf16.mxu0 0
      %585 = vmatpush1.bf16.msra.mxu0 0
      %586 = vmatprep.subr.bf16.mxu0 0
      %587 = vmatpush1.bf16.msra.mxu0 0
      %588 = vmatprep.subr.bf16.mxu0 0
      %589 = vmatpush1.bf16.msra.mxu0 0
      %590 = vmatprep.subr.bf16.mxu0 0
      %591 = vmatpush1.bf16.msra.mxu0 0
      %592 = vmatprep.mubr.bf16.mxu0 0
      %593 = vmatmul.mubr.bf16.gmra.mrb[0].mxu0 %v366
      %v594 = vpop.f32.mrb[0].mxu0
      %v595 = vadd.f32 0.0, %v594
      %v596 = vpop.f32.mrb[0].mxu0
      %v597 = vpop.f32.mrb[0].mxu0
      %v598 = vpop.f32.mrb[0].mxu0
      %599 = vdwg.mxu0
      %v600 = vlaneseq
      %v601 = vshrl.u32 %v600, 7
      %v602 = vsub.s32 1, %v601
      %v603 = vrot.slane %v312, %v602
      %v604 = vmul.f32 %v595, %v603
      %v605 = vadd.f32 %v494, %v604
      %v606 = vlaneseq
      %v607 = vshrl.u32 %v606, 7
      %v608 = vsub.s32 4, %v607
      %v609 = vrot.slane %v312, %v608
      %v610 = vmul.f32 %v595, %v609
      %v612 = vrot.slane %v610, 1
      %v614 = vadd.f32 %v605, %v612
      %v615 = vlaneseq
      %v616 = vshrl.u32 %v615, 7
      %v617 = vsub.s32 7, %v616
      %v618 = vrot.slane %v312, %v617
      %v619 = vmul.f32 %v595, %v618
      %v621 = vrot.slane %v619, 2
      %v623 = vadd.f32 %v614, %v621
      %s624 = scalar_lea.vmem %s2, 128
      %v625 = vld [vmem:[%s624] sm:$0xf]
      %v626 = vld [vmem:[%s624 + $0x4] sm:$0xf]
      %v627 = vld [vmem:[%s624 + $0x8] sm:$0xf]
      %v628 = vld [vmem:[%s624 + $0xc] sm:$0xf]
      %v629 = vld [vmem:[%s624 + $0x10] sm:$0xf]
      %v630 = vld [vmem:[%s624 + $0x14] sm:$0xf]
      %v631 = vld [vmem:[%s624 + $0x18] sm:$0xf]
      %v632 = vld [vmem:[%s624 + $0x1c] sm:$0xf]
      %v633 = vld [vmem:[%s624 + $0x20] sm:$0xf]
      %v634 = vld [vmem:[%s624 + $0x24] sm:$0xf]
      %v635 = vld [vmem:[%s624 + $0x28] sm:$0xf]
      %v636 = vld [vmem:[%s624 + $0x2c] sm:$0xf]
      %v637 = vld [vmem:[%s624 + $0x30] sm:$0xf]
      %v638 = vld [vmem:[%s624 + $0x34] sm:$0xf]
      %v639 = vld [vmem:[%s624 + $0x38] sm:$0xf]
      %v640 = vld [vmem:[%s624 + $0x3c] sm:$0xf]
      %v657 = vunpack.c.l.b16 %v625
      %v658 = vunpack.c.l.b16 %v626
      %v659 = vunpack.c.l.b16 %v627
      %v660 = vunpack.c.l.b16 %v628
      %v661 = vunpack.c.l.b16 %v629
      %v662 = vunpack.c.l.b16 %v630
      %v663 = vunpack.c.l.b16 %v631
      %v664 = vunpack.c.l.b16 %v632
      %v665 = vunpack.c.l.b16 %v633
      %v666 = vunpack.c.l.b16 %v634
      %v667 = vunpack.c.l.b16 %v635
      %v668 = vunpack.c.l.b16 %v636
      %v669 = vunpack.c.l.b16 %v637
      %v670 = vunpack.c.l.b16 %v638
      %v671 = vunpack.c.l.b16 %v639
      %v672 = vunpack.c.l.b16 %v640
      %v673 = vpack.c.b16 %v658, %v657
      %v674 = vpack.c.b16 %v660, %v659
      %v675 = vpack.c.b16 %v662, %v661
      %v676 = vpack.c.b16 %v664, %v663
      %v677 = vpack.c.b16 %v666, %v665
      %v678 = vpack.c.b16 %v668, %v667
      %v679 = vpack.c.b16 %v670, %v669
      %v680 = vpack.c.b16 %v672, %v671
      %689 = vmatprep.subr.bf16.mxu0 0
      %690 = vmatpush1.bf16.msra.mxu0 %v673
      %691 = vmatprep.subr.bf16.mxu0 0
      %692 = vmatpush1.bf16.msra.mxu0 %v674
      %693 = vmatprep.subr.bf16.mxu0 0
      %694 = vmatpush1.bf16.msra.mxu0 %v675
      %695 = vmatprep.subr.bf16.mxu0 0
      %696 = vmatpush1.bf16.msra.mxu0 %v676
      %697 = vmatprep.subr.bf16.mxu0 0
      %698 = vmatpush1.bf16.msra.mxu0 %v677
      %699 = vmatprep.subr.bf16.mxu0 0
      %700 = vmatpush1.bf16.msra.mxu0 %v678
      %701 = vmatprep.subr.bf16.mxu0 0
      %702 = vmatpush1.bf16.msra.mxu0 %v679
      %703 = vmatprep.subr.bf16.mxu0 0
      %704 = vmatpush1.bf16.msra.mxu0 %v680
      %705 = vmatprep.subr.bf16.mxu0 0
      %706 = vmatpush1.bf16.msra.mxu0 0
      %707 = vmatprep.subr.bf16.mxu0 0
      %708 = vmatpush1.bf16.msra.mxu0 0
      %709 = vmatprep.subr.bf16.mxu0 0
      %710 = vmatpush1.bf16.msra.mxu0 0
      %711 = vmatprep.subr.bf16.mxu0 0
      %712 = vmatpush1.bf16.msra.mxu0 0
      %713 = vmatprep.subr.bf16.mxu0 0
      %714 = vmatpush1.bf16.msra.mxu0 0
      %715 = vmatprep.subr.bf16.mxu0 0
      %716 = vmatpush1.bf16.msra.mxu0 0
      %717 = vmatprep.subr.bf16.mxu0 0
      %718 = vmatpush1.bf16.msra.mxu0 0
      %719 = vmatprep.subr.bf16.mxu0 0
      %720 = vmatpush1.bf16.msra.mxu0 0
      %721 = vmatprep.mubr.bf16.mxu0 0
      %722 = vmatmul.mubr.bf16.gmra.mrb[0].mxu0 %v366
      %v723 = vpop.f32.mrb[0].mxu0
      %v724 = vadd.f32 0.0, %v723
      %v725 = vpop.f32.mrb[0].mxu0
      %v726 = vpop.f32.mrb[0].mxu0
      %v727 = vpop.f32.mrb[0].mxu0
      %728 = vdwg.mxu0
      %v729 = vlaneseq
      %v730 = vshrl.u32 %v729, 7
      %v731 = vsub.s32 2, %v730
      %v732 = vrot.slane %v312, %v731
      %v733 = vmul.f32 %v724, %v732
      %v734 = vadd.f32 %v623, %v733
      %v735 = vlaneseq
      %v736 = vshrl.u32 %v735, 7
      %v737 = vsub.s32 5, %v736
      %v738 = vrot.slane %v312, %v737
      %v739 = vmul.f32 %v724, %v738
      %v741 = vrot.slane %v739, 1
      %v743 = vadd.f32 %v734, %v741
      %v744 = vlaneseq
      %v745 = vshrl.u32 %v744, 7
      %v746 = vsub.s32 0, %v745
      %v747 = vrot.slane %v313, %v746
      %v748 = vmul.f32 %v724, %v747
      %v750 = vrot.slane %v748, 2
      %v752 = vadd.f32 %v743, %v750
      %v753 = vlaneseq
      %v754 = vshrl.u32 %v753, 7
      %v755 = vsub.s32 1, %v754
      %v756 = vrot.slane %v313, %v755
      %v757 = vadd.f32 %v752, %v756
      %v758 = vmax.f32 %v757, 0.0
      %v759 = vpack.c.bf16 %v758, %v758
      %v765 = vunpack.c.l.b16 %v307
      %v766 = vunpack.c.l.b16 %v308
      %v767 = vunpack.c.l.b16 %v309
      %v768 = vunpack.c.l.b16 %v310
      %v769 = vunpack.c.l.b16 %v311
      %v770 = vpack.c.b16 %v766, %v765
      %v771 = vpack.c.b16 %v768, %v767
      %v772 = vpack.c.b16 %v769, %v769
      %vm775 = vcmask 326656
      %v777 = vsel %vm775, %v759, 0
      %vm779 = vcmask 1043456
      %v781 = vsel %vm779, %v772, 0
      %783 = vmatprep.subr.bf16.mxu0 0
      %784 = vmatpush1.bf16.msra.mxu0 %v770
      %785 = vmatprep.subr.bf16.mxu0 0
      %786 = vmatpush1.bf16.msra.mxu0 %v771
      %787 = vmatprep.subr.bf16.mxu0 0
      %788 = vmatpush1.bf16.msra.mxu0 %v781
      %789 = vmatprep.subr.bf16.mxu0 0
      %790 = vmatpush1.bf16.msra.mxu0 0
      %791 = vmatprep.subr.bf16.mxu0 0
      %792 = vmatpush1.bf16.msra.mxu0 0
      %793 = vmatprep.subr.bf16.mxu0 0
      %794 = vmatpush1.bf16.msra.mxu0 0
      %795 = vmatprep.subr.bf16.mxu0 0
      %796 = vmatpush1.bf16.msra.mxu0 0
      %797 = vmatprep.subr.bf16.mxu0 0
      %798 = vmatpush1.bf16.msra.mxu0 0
      %799 = vmatprep.subr.bf16.mxu0 0
      %800 = vmatpush1.bf16.msra.mxu0 0
      %801 = vmatprep.subr.bf16.mxu0 0
      %802 = vmatpush1.bf16.msra.mxu0 0
      %803 = vmatprep.subr.bf16.mxu0 0
      %804 = vmatpush1.bf16.msra.mxu0 0
      %805 = vmatprep.subr.bf16.mxu0 0
      %806 = vmatpush1.bf16.msra.mxu0 0
      %807 = vmatprep.subr.bf16.mxu0 0
      %808 = vmatpush1.bf16.msra.mxu0 0
      %809 = vmatprep.subr.bf16.mxu0 0
      %810 = vmatpush1.bf16.msra.mxu0 0
      %811 = vmatprep.subr.bf16.mxu0 0
      %812 = vmatpush1.bf16.msra.mxu0 0
      %813 = vmatprep.subr.bf16.mxu0 0
      %814 = vmatpush1.bf16.msra.mxu0 0
      %815 = vmatprep.mubr.bf16.mxu0 0
      %816 = vmatmul.mubr.bf16.gmra.mrb[0].mxu0 %v777
      %v817 = vpop.f32.mrb[0].mxu0
      %v818 = vadd.f32 0.0, %v817
      %v819 = vpop.f32.mrb[0].mxu0
      %v820 = vpop.f32.mrb[0].mxu0
      %v821 = vpop.f32.mrb[0].mxu0
      %822 = vdwg.mxu0
      %v823 = vpack.c.bf16 %v818, %v818
      %v826 = vunpack.c.l.b16 %v305
      %v827 = vunpack.c.l.b16 %v306
      %v828 = vpack.c.b16 %v827, %v826
      %vm829 = vcmask 39936
      %v831 = vsel %vm829, %v828, 0
      %vm833 = vcmask 1041408
      %vm834 = vcmask 1042432
      %v835 = vsel %vm833, 4294967295, 65535
      %v836 = vsel %vm834, %v835, 0
      %v838 = vand.u32 %v823, %v836
      %840 = vmatprep.subr.bf16.mxu0 0
      %841 = vmatpush1.bf16.msra.mxu0 %v838
      %842 = vmatprep.subr.bf16.mxu0 0
      %843 = vmatpush1.bf16.msra.mxu0 0
      %844 = vmatprep.subr.bf16.mxu0 0
      %845 = vmatpush1.bf16.msra.mxu0 0
      %846 = vmatprep.subr.bf16.mxu0 0
      %847 = vmatpush1.bf16.msra.mxu0 0
      %848 = vmatprep.subr.bf16.mxu0 0
      %849 = vmatpush1.bf16.msra.mxu0 0
      %850 = vmatprep.subr.bf16.mxu0 0
      %851 = vmatpush1.bf16.msra.mxu0 0
      %852 = vmatprep.subr.bf16.mxu0 0
      %853 = vmatpush1.bf16.msra.mxu0 0
      %854 = vmatprep.subr.bf16.mxu0 0
      %855 = vmatpush1.bf16.msra.mxu0 0
      %856 = vmatprep.subr.bf16.mxu0 0
      %857 = vmatpush1.bf16.msra.mxu0 0
      %858 = vmatprep.subr.bf16.mxu0 0
      %859 = vmatpush1.bf16.msra.mxu0 0
      %860 = vmatprep.subr.bf16.mxu0 0
      %861 = vmatpush1.bf16.msra.mxu0 0
      %862 = vmatprep.subr.bf16.mxu0 0
      %863 = vmatpush1.bf16.msra.mxu0 0
      %864 = vmatprep.subr.bf16.mxu0 0
      %865 = vmatpush1.bf16.msra.mxu0 0
      %866 = vmatprep.subr.bf16.mxu0 0
      %867 = vmatpush1.bf16.msra.mxu0 0
      %868 = vmatprep.subr.bf16.mxu0 0
      %869 = vmatpush1.bf16.msra.mxu0 0
      %870 = vmatprep.subr.bf16.mxu0 0
      %871 = vmatpush1.bf16.msra.mxu0 0
      %872 = vmatprep.mubr.bf16.mxu0 0
      %873 = vmatmul.mubr.bf16.gmra.mrb[0].mxu0 %v831
      %v874 = vpop.f32.mrb[0].mxu0
      %v875 = vadd.f32 0.0, %v874
      %v876 = vpop.f32.mrb[0].mxu0
      %v877 = vpop.f32.mrb[0].mxu0
      %v878 = vadd.f32 0.0, %v877
      %v879 = vpop.f32.mrb[0].mxu0
      %880 = vdwg.mxu0
      %881 = vst [vmem:[%s302] sm:$0xff] %v875
      %882 = vst [vmem:[%s302 + $0x8] sm:$0xff] %v878
      %p883 = scmp.lt.s32.totalorder %s21, 1
      %s884 = scalar_select %p883, %s21, 1
      %p885 = scmp.lt.s32.totalorder %s22, 0
      %s886 = scalar_select %p885, %s22, 0
      %s887 = smul.addr %s884, 2
      %s888 = sadd.s32 %s886, %s887
      %s889 = smul.addr %s888, 8
      %s890 = scalar_lea.vmem %s6, %s889
      // Predicated region
      $region45: #{s2block_forward.1} parent=43 // pred_check
        %p891 = pneg %p187
      $region46: #{s2block_forward.1} parent=43 // pred_check_branch
        %893 = sbr.rel (%p891) target = $region48
      $region47: #{s2block_forward.1} parent=43 // pred_region
        _
      $region48: #{s2block_forward.1} parent=43 // pred_fallthru
        _
    $region44: #{s2block_forward.1} parent=5 // pred_fallthru
      _
    %p894 = scmp.le.s32.totalorder 2, %s12
    // Predicated region
    $region49: #{s2block_forward.1} parent=5 // pred_check
      %p895 = pneg %p894
    $region50: #{s2block_forward.1} parent=5 // pred_check_branch
      %897 = sbr.rel (%p895) target = $region52
    $region51: #{s2block_forward.1} parent=5 // pred_region
      %s898 = ssub.s32 %s12, 2
      // Predicated region
      $region53: #{s2block_forward.1} parent=51 // pred_check
        %p899 = pneg %p193
      $region54: #{s2block_forward.1} parent=51 // pred_check_branch
        %901 = sbr.rel (%p899) target = $region56
      $region55: #{s2block_forward.1} parent=51 // pred_region
        %p902 = scmp.lt.s32.totalorder %s23, 1
        %s903 = scalar_select %p902, %s23, 1
        %p904 = scmp.lt.s32.totalorder %s24, 0
        %s905 = scalar_select %p904, %s24, 0
        %s906 = smul.addr %s903, 2
        %s907 = sadd.s32 %s905, %s906
        %s908 = smul.addr %s907, 8
        %s909 = scalar_lea.vmem %s6, %s908
      $region56: #{s2block_forward.1} parent=51 // pred_fallthru
        _
    $region52: #{s2block_forward.1} parent=5 // pred_fallthru
      _
  $region6: #{s2block_forward.1} parent=0 // loop_footer
    %s16 = sadd.s32 1, %s12
  $region7: #{s2block_forward.1} parent=0 // loop_footer_branch
    %11 = sbr.rel target = $region3
  $region8: #{s2block_forward.1} parent=0 // loop_exit
    _

</llo_original>
